<compile_context>
chip_gen: v6e
topology: v6e:2x2x1
jax: 0.10.0
libtpu: 0.0.40
codegen_flags: <defaults>
</compile_context>

<pallas_src>
import jax
import jax.numpy as jnp
from jax.experimental import pallas as pl
from jax.experimental.pallas import tpu as pltpu


# --------------------------------------------------------------------------
# VMEM sizing helpers
# --------------------------------------------------------------------------
def _round_up(x, m):
    return ((x + m - 1) // m) * m


def _vmem_budgets():
    """(class-tile block budget, vmem_limit_bytes) — generation aware."""
    try:
        cap = int(pltpu.get_tpu_info().vmem_capacity_bytes)
        if cap <= 0:
            raise ValueError("bad vmem capacity")
    except Exception:
        cap = 64 << 20          # conservative fallback: v7x per-TensorCore VMEM
    return int(cap * 0.60), int(cap * 0.85)


def _per_class_vmem_bytes(n_ctx, n_suf, ctx_dim, itemsize):
    """VMEM bytes per class row of a tile, including double buffering,
    sublane padding, and the in-kernel ctx broadcast intermediate."""
    n_tkn = 1 + n_ctx + n_suf
    lanes = _round_up(ctx_dim, 128)
    return lanes * itemsize * (
        2 * _round_up(n_tkn, 8)      # output block (double buffered)
        + 2 * _round_up(n_suf, 8)    # suffix block (double buffered)
        + 2 * 8                      # prefix block: size-1 token dim pads to 8 sublanes
        + _round_up(n_ctx, 8)        # in-kernel broadcast of the shifted ctx
    )


def _fixed_resident_vmem_bytes(B, vis_dim, hidden, n_ctx, ctx_dim, itemsize):
    """Constant-index (resident) blocks: im_features, MLP params, ctx."""
    def blk(rows, cols):
        return 2 * _round_up(max(rows, 1), 8) * _round_up(max(cols, 1), 128) * itemsize
    return (blk(B, vis_dim) + blk(vis_dim, hidden) + blk(1, hidden)
            + blk(hidden, ctx_dim) + blk(1, ctx_dim) + blk(n_ctx, ctx_dim))


# --------------------------------------------------------------------------
# Kernel: fused meta-net MLP + prompt assembly.
# grid = (n_class_tiles, B); class tile OUTER, batch INNER.
# --------------------------------------------------------------------------
def prompt_assemble_kernel(im_ref, w1_ref, b1_ref, w2_ref, b2_ref,
                           ctx_ref, pre_ref, suf_ref, out_ref):
    b = pl.program_id(1)                       # batch index (inner grid axis)
    n_ctx = ctx_ref.shape[0]
    tc, n_tkn, ctx_dim = out_ref.shape

    # ---- meta-net MLP for this image row (fused; recomputed per step) ----
    # Tiny (1 x vis_dim) matvecs: fully hidden under the output-tile DMA, and
    # being stateless keeps the kernel correct under megacore grid sharding.
    im_row = im_ref[pl.ds(b, 1), :]                                    # (1, vis_dim)
    h = jnp.dot(im_row, w1_ref[...],
                preferred_element_type=jnp.float32) + b1_ref[...]
    h = jnp.maximum(h, 0.0)                                            # ReLU
    bias = jnp.dot(h, w2_ref[...],
                   preferred_element_type=jnp.float32) + b2_ref[...]   # (1, ctx_dim)

    ctx_shifted = (ctx_ref[...].astype(jnp.float32) + bias).astype(out_ref.dtype)

    # ---- three direct sub-range stores; no full-slab concatenate ----
    out_ref[:, 0:1, :] = pre_ref[...].astype(out_ref.dtype)            # prefix (tc, 1, ctx_dim)
    out_ref[:, 1:1 + n_ctx, :] = jnp.broadcast_to(
        ctx_shifted[None, :, :], (tc, n_ctx, ctx_dim))                 # shifted ctx
    out_ref[:, 1 + n_ctx:, :] = suf_ref[...].astype(out_ref.dtype)     # suffix


# --------------------------------------------------------------------------
# Wrapper
# --------------------------------------------------------------------------
def prompt_learner_forward(im_features, w1, b1, w2, b2, ctx,
                           token_prefix, token_suffix,
                           class_tile=None, out_dtype=None):
    B, vis_dim = im_features.shape
    n_ctx, ctx_dim = ctx.shape
    hidden = w1.shape[1]
    n_cls = token_prefix.shape[0]
    n_suf = token_suffix.shape[1]
    n_tkn = 1 + n_ctx + n_suf

    if out_dtype is None:
        out_dtype = token_prefix.dtype   # pass jnp.bfloat16 for ~2x write-BW if allowed
    out_dtype = jnp.dtype(out_dtype)

    b1 = jnp.reshape(b1, (1, hidden))
    b2 = jnp.reshape(b2, (1, ctx_dim))

    tile_budget, vmem_limit = _vmem_budgets()
    per_class = _per_class_vmem_bytes(n_ctx, n_suf, ctx_dim, out_dtype.itemsize)
    fixed = _fixed_resident_vmem_bytes(B, vis_dim, hidden, n_ctx, ctx_dim,
                                       jnp.dtype(w1.dtype).itemsize)

    if class_tile is None:
        avail = tile_budget - fixed - (2 << 20)          # slack for compiler internals
        tc = max(1, avail // per_class)
        tc = int(min(tc, n_cls))
        # With B == 1, keep >= 2 class tiles so v7x's two TensorCores both get work.
        if B == 1 and n_cls >= 2 and pl.cdiv(n_cls, tc) < 2:
            tc = int(pl.cdiv(n_cls, 2))
    else:
        tc = int(min(class_tile, n_cls))
    n_ct = int(pl.cdiv(n_cls, tc))

    # Declared limit must cover what we actually allocate (stays < physical).
    vmem_limit = int(max(vmem_limit, fixed + tc * per_class + (4 << 20)))

    return pl.pallas_call(
        prompt_assemble_kernel,
        out_shape=jax.ShapeDtypeStruct((B, n_cls, n_tkn, ctx_dim), out_dtype),
        grid=(n_ct, B),                                  # class tile OUTER, batch INNER
        in_specs=[
            # Resident (constant-index) small blocks: whole batch of image
            # features + meta-net params + ctx — DMA'd once, reused every step.
            pl.BlockSpec((B, vis_dim),         lambda ct, b: (0, 0)),
            pl.BlockSpec((vis_dim, hidden),    lambda ct, b: (0, 0)),
            pl.BlockSpec((1, hidden),          lambda ct, b: (0, 0)),
            pl.BlockSpec((hidden, ctx_dim),    lambda ct, b: (0, 0)),
            pl.BlockSpec((1, ctx_dim),         lambda ct, b: (0, 0)),
            pl.BlockSpec((n_ctx, ctx_dim),     lambda ct, b: (0, 0)),
            # prefix/suffix depend only on the class-tile index: they stay
            # VMEM-resident across the inner batch loop (read from HBM once).
            pl.BlockSpec((tc, 1, ctx_dim),     lambda ct, b: (ct, 0, 0)),
            pl.BlockSpec((tc, n_suf, ctx_dim), lambda ct, b: (ct, 0, 0)),
        ],
        out_specs=pl.BlockSpec((None, tc, n_tkn, ctx_dim),
                               lambda ct, b: (b, ct, 0, 0)),
        compiler_params=pltpu.CompilerParams(
            dimension_semantics=("parallel", "parallel"),
            vmem_limit_bytes=vmem_limit),
    )(im_features, w1, b1, w2, b2, ctx, token_prefix, token_suffix)


# --------------------------------------------------------------------------
# Plain-JAX reference mirroring the PyTorch forward
# --------------------------------------------------------------------------
def reference_forward(im_features, w1, b1, w2, b2, ctx, token_prefix, token_suffix):
    hp = jax.lax.Precision.HIGHEST
    h = jnp.maximum(jnp.dot(im_features, w1, precision=hp) + b1.reshape(1, -1), 0.0)
    bias = jnp.dot(h, w2, precision=hp) + b2.reshape(1, -1)             # (B, ctx_dim)
    ctx_shifted = ctx[None, :, :] + bias[:, None, :]                    # (B, n_ctx, ctx_dim)
    B = im_features.shape[0]
    n_cls = token_prefix.shape[0]
    ctx_b = jnp.broadcast_to(ctx_shifted[:, None], (B, n_cls) + ctx_shifted.shape[1:])
    pre_b = jnp.broadcast_to(token_prefix[None], (B,) + token_prefix.shape)
    suf_b = jnp.broadcast_to(token_suffix[None], (B,) + token_suffix.shape)
    return jnp.concatenate([pre_b, ctx_b.astype(token_prefix.dtype), suf_b], axis=2)


if __name__ == "__main__":
    # Small, CoCoOp-consistent shapes.
    B = 2            # batch of image features
    vis_dim = 256    # clip_model.visual.output_dim
    hidden = vis_dim // 16
    ctx_dim = 128    # clip_model.ln_final.weight.shape[0]
    n_ctx = 4        # cfg.TRAINER.COCOOP.N_CTX
    n_cls = 10       # number of classnames
    n_tkn = 16       # tokenized prompt length
    n_suf = n_tkn - 1 - n_ctx

    key = jax.random.PRNGKey(0)
    ks = jax.random.split(key, 8)
    dt = jnp.float32

    # nn.Linear weights stored pre-transposed (in_features, out_features).
    im_features = jax.random.normal(ks[0], (B, vis_dim), dt)
    w1 = jax.random.normal(ks[1], (vis_dim, hidden), dt) * 0.02
    b1 = jax.random.normal(ks[2], (1, hidden), dt) * 0.02
    w2 = jax.random.normal(ks[3], (hidden, ctx_dim), dt) * 0.02
    b2 = jax.random.normal(ks[4], (1, ctx_dim), dt) * 0.02
    ctx = jax.random.normal(ks[5], (n_ctx, ctx_dim), dt) * 0.02         # nn.init.normal_(std=0.02)
    # TODO(synk): CLIP tokenizer / token_embedding run host-side in __init__;
    # the registered prefix/suffix buffers are synthesized here as kernel inputs.
    token_prefix = jax.random.normal(ks[6], (n_cls, 1, ctx_dim), dt)      # SOS embedding
    token_suffix = jax.random.normal(ks[7], (n_cls, n_suf, ctx_dim), dt)  # class + EOS embeddings

    ref = reference_forward(im_features, w1, b1, w2, b2, ctx,
                            token_prefix, token_suffix)

    # 1) auto-picked class tile (single tile at this size)
    out = prompt_learner_forward(im_features, w1, b1, w2, b2, ctx,
                                 token_prefix, token_suffix)
    out = jax.block_until_ready(out)
    assert out.shape == (B, n_cls, n_tkn, ctx_dim), out.shape
    assert jnp.allclose(out, ref, atol=1e-3, rtol=1e-3)

    # 2) forced small class tile -> multi-tile grid with a ragged last tile
    out2 = prompt_learner_forward(im_features, w1, b1, w2, b2, ctx,
                                  token_prefix, token_suffix, class_tile=4)
    out2 = jax.block_until_ready(out2)
    assert jnp.allclose(out2, ref, atol=1e-3, rtol=1e-3)

    print("KERNEL_OK")
</pallas_src>

<mosaic_0001>
module attributes {stable_mosaic.version = 11 : i64} {
  func.func @prompt_assemble_kernel(%arg0: i32, %arg1: i32, %arg2: memref<2x256xf32, #tpu.memory_space<vmem>>, %arg3: memref<256x16xf32, #tpu.memory_space<vmem>>, %arg4: memref<1x16xf32, #tpu.memory_space<vmem>>, %arg5: memref<16x128xf32, #tpu.memory_space<vmem>>, %arg6: memref<1x128xf32, #tpu.memory_space<vmem>>, %arg7: memref<4x128xf32, #tpu.memory_space<vmem>>, %arg8: memref<10x1x128xf32, #tpu.memory_space<vmem>>, %arg9: memref<10x11x128xf32, #tpu.memory_space<vmem>>, %arg10: memref<1x10x16x128xf32, #tpu.memory_space<vmem>>) attributes {dimension_semantics = [#tpu.dimension_semantics<parallel>, #tpu.dimension_semantics<parallel>], iteration_bounds = array<i64: 1, 2>, scalar_prefetch = 0 : i64, scratch_operands = 0 : i64, tpu.core_type = #tpu.core_type<tc>, window_params = [{pipeline_mode = #tpu.pipeline_mode<synchronous>, transform_indices = @transform_0, window_bounds = array<i64: 2, 256>}, {pipeline_mode = #tpu.pipeline_mode<synchronous>, transform_indices = @transform_1, window_bounds = array<i64: 256, 16>}, {pipeline_mode = #tpu.pipeline_mode<synchronous>, transform_indices = @transform_2, window_bounds = array<i64: 1, 16>}, {pipeline_mode = #tpu.pipeline_mode<synchronous>, transform_indices = @transform_3, window_bounds = array<i64: 16, 128>}, {pipeline_mode = #tpu.pipeline_mode<synchronous>, transform_indices = @transform_4, window_bounds = array<i64: 1, 128>}, {pipeline_mode = #tpu.pipeline_mode<synchronous>, transform_indices = @transform_5, window_bounds = array<i64: 4, 128>}, {transform_indices = @transform_6, window_bounds = array<i64: 10, 1, 128>}, {transform_indices = @transform_7, window_bounds = array<i64: 10, 11, 128>}, {transform_indices = @transform_8, window_bounds = array<i64: 1, 10, 16, 128>}]} {
    %0 = arith.index_cast %arg1 : i32 to index
    %c0 = arith.constant 0 : index
    %1 = vector.load %arg2[%0, %c0] : memref<2x256xf32, #tpu.memory_space<vmem>>, vector<1x256xf32>
    %c0_0 = arith.constant 0 : index
    %c0_1 = arith.constant 0 : index
    %2 = vector.load %arg3[%c0_0, %c0_1] : memref<256x16xf32, #tpu.memory_space<vmem>>, vector<256x16xf32>
    %cst = arith.constant dense<0.000000e+00> : vector<1x16xf32>
    %3 = tpu.matmul %1, %2, %cst {dimension_numbers = #tpu.dot_dimension_numbers<[1], [0], [0], [1], [0, 0, 1, 1], [], []>} : vector<1x256xf32>, vector<256x16xf32>, vector<1x16xf32> -> vector<1x16xf32>
    %c0_2 = arith.constant 0 : index
    %c0_3 = arith.constant 0 : index
    %4 = vector.load %arg4[%c0_2, %c0_3] : memref<1x16xf32, #tpu.memory_space<vmem>>, vector<1x16xf32>
    %5 = arith.addf %3, %4 : vector<1x16xf32>
    %cst_4 = arith.constant 0.000000e+00 : f32
    %6 = vector.broadcast %cst_4 : f32 to vector<1x16xf32>
    %7 = arith.maximumf %5, %6 : vector<1x16xf32>
    %c0_5 = arith.constant 0 : index
    %c0_6 = arith.constant 0 : index
    %8 = vector.load %arg5[%c0_5, %c0_6] : memref<16x128xf32, #tpu.memory_space<vmem>>, vector<16x128xf32>
    %cst_7 = arith.constant dense<0.000000e+00> : vector<1x128xf32>
    %9 = tpu.matmul %7, %8, %cst_7 {dimension_numbers = #tpu.dot_dimension_numbers<[1], [0], [0], [1], [0, 0, 1, 1], [], []>} : vector<1x16xf32>, vector<16x128xf32>, vector<1x128xf32> -> vector<1x128xf32>
    %c0_8 = arith.constant 0 : index
    %c0_9 = arith.constant 0 : index
    %10 = vector.load %arg6[%c0_8, %c0_9] : memref<1x128xf32, #tpu.memory_space<vmem>>, vector<1x128xf32>
    %11 = arith.addf %9, %10 : vector<1x128xf32>
    %c0_10 = arith.constant 0 : index
    %c0_11 = arith.constant 0 : index
    %12 = vector.load %arg7[%c0_10, %c0_11] : memref<4x128xf32, #tpu.memory_space<vmem>>, vector<4x128xf32>
    %13 = vector.broadcast %11 : vector<1x128xf32> to vector<4x128xf32>
    %14 = arith.addf %12, %13 : vector<4x128xf32>
    %c0_12 = arith.constant 0 : index
    %c0_13 = arith.constant 0 : index
    %c0_14 = arith.constant 0 : index
    %15 = vector.load %arg8[%c0_12, %c0_13, %c0_14] : memref<10x1x128xf32, #tpu.memory_space<vmem>>, vector<10x1x128xf32>
    %c0_15 = arith.constant 0 : index
    %c0_16 = arith.constant 0 : index
    %c0_17 = arith.constant 0 : index
    %c0_18 = arith.constant 0 : index
    %16 = vector.load %arg10[%c0_15, %c0_16, %c0_17, %c0_18] : memref<1x10x16x128xf32, #tpu.memory_space<vmem>>, vector<1x10x1x128xf32>
    %17 = vector.shape_cast %16 : vector<1x10x1x128xf32> to vector<10x1x128xf32>
    %18 = vector.shape_cast %15 : vector<10x1x128xf32> to vector<1x10x1x128xf32>
    tpu.vector_store %arg10[%c0_15, %c0_16, %c0_17, %c0_18], %18 {strides = array<i32>} : memref<1x10x16x128xf32, #tpu.memory_space<vmem>>, vector<1x10x1x128xf32>,
    %19 = vector.shape_cast %14 : vector<4x128xf32> to vector<1x4x128xf32>
    %20 = vector.shape_cast %19 : vector<1x4x128xf32> to vector<1x4x128xf32>
    %21 = vector.broadcast %20 : vector<1x4x128xf32> to vector<10x4x128xf32>
    %c0_19 = arith.constant 0 : index
    %c0_20 = arith.constant 0 : index
    %c1 = arith.constant 1 : index
    %c0_21 = arith.constant 0 : index
    %22 = vector.load %arg10[%c0_19, %c0_20, %c1, %c0_21] : memref<1x10x16x128xf32, #tpu.memory_space<vmem>>, vector<1x10x4x128xf32>
    %23 = vector.shape_cast %22 : vector<1x10x4x128xf32> to vector<10x4x128xf32>
    %24 = vector.shape_cast %21 : vector<10x4x128xf32> to vector<1x10x4x128xf32>
    tpu.vector_store %arg10[%c0_19, %c0_20, %c1, %c0_21], %24 {strides = array<i32>} : memref<1x10x16x128xf32, #tpu.memory_space<vmem>>, vector<1x10x4x128xf32>,
    %c0_22 = arith.constant 0 : index
    %c0_23 = arith.constant 0 : index
    %c0_24 = arith.constant 0 : index
    %25 = vector.load %arg9[%c0_22, %c0_23, %c0_24] : memref<10x11x128xf32, #tpu.memory_space<vmem>>, vector<10x11x128xf32>
    %c0_25 = arith.constant 0 : index
    %c0_26 = arith.constant 0 : index
    %c5 = arith.constant 5 : index
    %c0_27 = arith.constant 0 : index
    %26 = vector.load %arg10[%c0_25, %c0_26, %c5, %c0_27] : memref<1x10x16x128xf32, #tpu.memory_space<vmem>>, vector<1x10x11x128xf32>
    %27 = vector.shape_cast %26 : vector<1x10x11x128xf32> to vector<10x11x128xf32>
    %28 = vector.shape_cast %25 : vector<10x11x128xf32> to vector<1x10x11x128xf32>
    tpu.vector_store %arg10[%c0_25, %c0_26, %c5, %c0_27], %28 {strides = array<i32>} : memref<1x10x16x128xf32, #tpu.memory_space<vmem>>, vector<1x10x11x128xf32>,
    return
  }
  func.func @transform_0(%arg0: i32, %arg1: i32) -> (i32, i32) {
    %c0_i32 = arith.constant 0 : i32
    %c0_i32_0 = arith.constant 0 : i32
    %c0_i32_1 = arith.constant 0 : i32
    return %c0_i32, %c0_i32_0 : i32, i32
  }
  func.func @transform_1(%arg0: i32, %arg1: i32) -> (i32, i32) {
    %c0_i32 = arith.constant 0 : i32
    %c0_i32_0 = arith.constant 0 : i32
    %c0_i32_1 = arith.constant 0 : i32
    return %c0_i32, %c0_i32_0 : i32, i32
  }
  func.func @transform_2(%arg0: i32, %arg1: i32) -> (i32, i32) {
    %c0_i32 = arith.constant 0 : i32
    %c0_i32_0 = arith.constant 0 : i32
    %c0_i32_1 = arith.constant 0 : i32
    return %c0_i32, %c0_i32_0 : i32, i32
  }
  func.func @transform_3(%arg0: i32, %arg1: i32) -> (i32, i32) {
    %c0_i32 = arith.constant 0 : i32
    %c0_i32_0 = arith.constant 0 : i32
    %c0_i32_1 = arith.constant 0 : i32
    return %c0_i32, %c0_i32_0 : i32, i32
  }
  func.func @transform_4(%arg0: i32, %arg1: i32) -> (i32, i32) {
    %c0_i32 = arith.constant 0 : i32
    %c0_i32_0 = arith.constant 0 : i32
    %c0_i32_1 = arith.constant 0 : i32
    return %c0_i32, %c0_i32_0 : i32, i32
  }
  func.func @transform_5(%arg0: i32, %arg1: i32) -> (i32, i32) {
    %c0_i32 = arith.constant 0 : i32
    %c0_i32_0 = arith.constant 0 : i32
    %c0_i32_1 = arith.constant 0 : i32
    return %c0_i32, %c0_i32_0 : i32, i32
  }
  func.func @transform_6(%arg0: i32, %arg1: i32) -> (i32, i32, i32) {
    %c0_i32 = arith.constant 0 : i32
    %c0_i32_0 = arith.constant 0 : i32
    %c0_i32_1 = arith.constant 0 : i32
    return %arg0, %c0_i32, %c0_i32_0 : i32, i32, i32
  }
  func.func @transform_7(%arg0: i32, %arg1: i32) -> (i32, i32, i32) {
    %c0_i32 = arith.constant 0 : i32
    %c0_i32_0 = arith.constant 0 : i32
    %c0_i32_1 = arith.constant 0 : i32
    return %arg0, %c0_i32, %c0_i32_0 : i32, i32, i32
  }
  func.func @transform_8(%arg0: i32, %arg1: i32) -> (i32, i32, i32, i32) {
    %c0_i32 = arith.constant 0 : i32
    %c0_i32_0 = arith.constant 0 : i32
    %c0_i32_1 = arith.constant 0 : i32
    return %arg1, %arg0, %c0_i32, %c0_i32_0 : i32, i32, i32, i32
  }
}

</mosaic_0001>

<llo_original>
// kernel: tpu_custom_call.1
$region0: #{tpu_custom_call.1}
  #allocation0 [shape = 'u32[]', space=smem, size = 0x4, offset = 0x4, fixed_abs, tag = 'smem constant byte address 0x4 - core index']
  #allocation1 [shape = 'u32[144,128]{1,0:T(1,128)}', space=vmem, size = 0x12000, scoped, tag = 'internal scratch']
  %s0 = inlined_call_operand.vmem [shape: f32[2,256], index: 0, kind: input, shape index: {}]
  %s1 = inlined_call_operand.vmem [shape: f32[256,16], index: 1, kind: input, shape index: {}]
  %s2 = inlined_call_operand.vmem [shape: f32[1,16], index: 2, kind: input, shape index: {}]
  %s3 = inlined_call_operand.vmem [shape: f32[16,128], index: 3, kind: input, shape index: {}]
  %s4 = inlined_call_operand.vmem [shape: f32[1,128], index: 4, kind: input, shape index: {}]
  %s5 = inlined_call_operand.vmem [shape: f32[4,128], index: 5, kind: input, shape index: {}]
  %s6 = inlined_call_operand.vmem [shape: f32[10,1,128], index: 6, kind: input, shape index: {}]
  %s7 = inlined_call_operand.vmem [shape: f32[10,11,128], index: 7, kind: input, shape index: {}]
  %s8 = inlined_call_operand.hbm [shape: f32[2,10,16,128], index: 8, kind: output, shape index: {}]
  %s9 = sld [smem:[#allocation0]]
  $region65: #{tpu_custom_call.1} parent=0
    _
  %s11 = ssub.s32 1, %s9
  %s12 = scalar_select 0, %s11, %s9
  $region1: #{tpu_custom_call.1} parent=0
    #allocation2 [shape = 'u8[163840]{0}', space=vmem, size = 0x28000, scoped, tag = 'output window, operand 0']
    #allocation3 [shape = 's32[2]{0}', space=sflag, size = 0x8, scoped, tag = 'scoped memory for tpu_custom_call.1']
    %13 = vsyncpa [#allocation3], 0
    %s14 = scalar_lea.sflag [#allocation3], 1
    %15 = vsyncpa %s14, 0
    loop: start=0, step=1, limit=4
    $region2: #{tpu_custom_call.1} parent=1 // loop_pre_header
      _
    $region3: #{tpu_custom_call.1} parent=1 // loop_header
      %s17 = sphi 0, %s21
      %p18 = scmp.ge.s32.totalorder %s17, 4
      %s24 = sphi 0, %s36
      %s25 = sphi 0, %s32
      %s26 = sphi 0, %s24
      %s27 = sphi 0, %s25
      %s28 = sphi 0, %s26
      %s29 = sphi 0, %s27
      %s37 = sphi 0, %s37
      %s39 = sphi 0, %s37
      %s40 = sphi 0, %s39
      %s54 = sphi 0, %s40
      %s58 = sphi 0, %s58
      %s60 = sphi 0, %s58
      %s61 = sphi 0, %s60
      %s75 = sphi 0, %s61
      %s79 = sphi 0, %s79
      %s81 = sphi 0, %s79
      %s82 = sphi 0, %s81
      %s96 = sphi 0, %s82
      %s100 = sphi 0, %s100
      %s102 = sphi 0, %s100
      %s103 = sphi 0, %s102
      %s117 = sphi 0, %s103
      %s121 = sphi 0, %s121
      %s123 = sphi 0, %s121
      %s124 = sphi 0, %s123
      %s138 = sphi 0, %s124
      %s142 = sphi 0, %s142
      %s144 = sphi 0, %s142
      %s145 = sphi 0, %s144
      %s159 = sphi 0, %s145
      %s165 = sphi 0, %s167
      %s168 = sphi 0, %s165
      %s169 = sphi 0, %s168
      %s185 = sphi 0, %s169
      %s191 = sphi 0, %s193
      %s194 = sphi 0, %s191
      %s195 = sphi 0, %s194
      %s211 = sphi 0, %s195
      %s219 = sphi 0, %s221
      %s222 = sphi 0, %s219
      %s223 = sphi 0, %s222
      %s239 = sphi 0, %s223
    $region4: #{tpu_custom_call.1} parent=1 // loop_header_branch
      %20 = sbr.rel (%p18) target = $region8
    $region5: #{tpu_custom_call.1} parent=1 // loop_body
      %s22 = ssub.s32 %s17, 1
      %s23 = ssub.s32 %s17, 2
      %s30 = sadd.s32 1, %s25
      %p31 = scmp.ge.s32.totalorder %s30, 2
      %s32 = scalar_select %p31, 0, %s30
      %s33 = sadd.s32 1, %s24
      %s34 = scalar_select %p31, %s33, %s24
      %p35 = scmp.ge.s32.totalorder %s34, 1
      %s36 = scalar_select %p35, 0, %s34
      %s38 = sadd.s32 %s37, 1
      %p41 = scmp.eq.s32.totalorder %s17, 1
      %p42 = scmp.ne.s32.totalorder %s37, %s39
      %p43 = scmp.eq.s32.totalorder %s17, 0
      %p44 = por %p42, %p43
      %p45 = scmp.ne.s32.totalorder %s37, %s39
      %p46 = scmp.eq.s32.totalorder %s22, 1
      %p47 = por %p45, %p46
      %p48 = scmp.ne.s32.totalorder %s39, %s40
      %p49 = scmp.eq.s32.totalorder %s22, 0
      %p50 = por %p48, %p49
      %p51 = scmp.ne.s32.totalorder %s39, %s40
      %p52 = scmp.eq.s32.totalorder %s23, 1
      %p53 = por %p51, %p52
      %p55 = scmp.ne.s32.totalorder %s40, %s54
      %p56 = scmp.eq.s32.totalorder %s23, 0
      %p57 = por %p55, %p56
      %s59 = sadd.s32 %s58, 1
      %p62 = scmp.eq.s32.totalorder %s17, 1
      %p63 = scmp.ne.s32.totalorder %s58, %s60
      %p64 = scmp.eq.s32.totalorder %s17, 0
      %p65 = por %p63, %p64
      %p66 = scmp.ne.s32.totalorder %s58, %s60
      %p67 = scmp.eq.s32.totalorder %s22, 1
      %p68 = por %p66, %p67
      %p69 = scmp.ne.s32.totalorder %s60, %s61
      %p70 = scmp.eq.s32.totalorder %s22, 0
      %p71 = por %p69, %p70
      %p72 = scmp.ne.s32.totalorder %s60, %s61
      %p73 = scmp.eq.s32.totalorder %s23, 1
      %p74 = por %p72, %p73
      %p76 = scmp.ne.s32.totalorder %s61, %s75
      %p77 = scmp.eq.s32.totalorder %s23, 0
      %p78 = por %p76, %p77
      %s80 = sadd.s32 %s79, 1
      %p83 = scmp.eq.s32.totalorder %s17, 1
      %p84 = scmp.ne.s32.totalorder %s79, %s81
      %p85 = scmp.eq.s32.totalorder %s17, 0
      %p86 = por %p84, %p85
      %p87 = scmp.ne.s32.totalorder %s79, %s81
      %p88 = scmp.eq.s32.totalorder %s22, 1
      %p89 = por %p87, %p88
      %p90 = scmp.ne.s32.totalorder %s81, %s82
      %p91 = scmp.eq.s32.totalorder %s22, 0
      %p92 = por %p90, %p91
      %p93 = scmp.ne.s32.totalorder %s81, %s82
      %p94 = scmp.eq.s32.totalorder %s23, 1
      %p95 = por %p93, %p94
      %p97 = scmp.ne.s32.totalorder %s82, %s96
      %p98 = scmp.eq.s32.totalorder %s23, 0
      %p99 = por %p97, %p98
      %s101 = sadd.s32 %s100, 1
      %p104 = scmp.eq.s32.totalorder %s17, 1
      %p105 = scmp.ne.s32.totalorder %s100, %s102
      %p106 = scmp.eq.s32.totalorder %s17, 0
      %p107 = por %p105, %p106
      %p108 = scmp.ne.s32.totalorder %s100, %s102
      %p109 = scmp.eq.s32.totalorder %s22, 1
      %p110 = por %p108, %p109
      %p111 = scmp.ne.s32.totalorder %s102, %s103
      %p112 = scmp.eq.s32.totalorder %s22, 0
      %p113 = por %p111, %p112
      %p114 = scmp.ne.s32.totalorder %s102, %s103
      %p115 = scmp.eq.s32.totalorder %s23, 1
      %p116 = por %p114, %p115
      %p118 = scmp.ne.s32.totalorder %s103, %s117
      %p119 = scmp.eq.s32.totalorder %s23, 0
      %p120 = por %p118, %p119
      %s122 = sadd.s32 %s121, 1
      %p125 = scmp.eq.s32.totalorder %s17, 1
      %p126 = scmp.ne.s32.totalorder %s121, %s123
      %p127 = scmp.eq.s32.totalorder %s17, 0
      %p128 = por %p126, %p127
      %p129 = scmp.ne.s32.totalorder %s121, %s123
      %p130 = scmp.eq.s32.totalorder %s22, 1
      %p131 = por %p129, %p130
      %p132 = scmp.ne.s32.totalorder %s123, %s124
      %p133 = scmp.eq.s32.totalorder %s22, 0
      %p134 = por %p132, %p133
      %p135 = scmp.ne.s32.totalorder %s123, %s124
      %p136 = scmp.eq.s32.totalorder %s23, 1
      %p137 = por %p135, %p136
      %p139 = scmp.ne.s32.totalorder %s124, %s138
      %p140 = scmp.eq.s32.totalorder %s23, 0
      %p141 = por %p139, %p140
      %s143 = sadd.s32 %s142, 1
      %p146 = scmp.eq.s32.totalorder %s17, 1
      %p147 = scmp.ne.s32.totalorder %s142, %s144
      %p148 = scmp.eq.s32.totalorder %s17, 0
      %p149 = por %p147, %p148
      %p150 = scmp.ne.s32.totalorder %s142, %s144
      %p151 = scmp.eq.s32.totalorder %s22, 1
      %p152 = por %p150, %p151
      %p153 = scmp.ne.s32.totalorder %s144, %s145
      %p154 = scmp.eq.s32.totalorder %s22, 0
      %p155 = por %p153, %p154
      %p156 = scmp.ne.s32.totalorder %s144, %s145
      %p157 = scmp.eq.s32.totalorder %s23, 1
      %p158 = por %p156, %p157
      %p160 = scmp.ne.s32.totalorder %s145, %s159
      %p161 = scmp.eq.s32.totalorder %s23, 0
      %p162 = por %p160, %p161
      %s163 = ssub.s32 %s24, %s36
      %p164 = scmp.eq.s32.totalorder %s163, 0
      %s166 = sadd.s32 %s165, 1
      %s167 = scalar_select %p164, %s165, %s166
      %p170 = pneg %p164
      %p171 = scmp.eq.s32.totalorder %s17, 1
      %p172 = por %p170, %p171
      %p173 = scmp.ne.s32.totalorder %s165, %s168
      %p174 = scmp.eq.s32.totalorder %s17, 0
      %p175 = por %p173, %p174
      %p176 = scmp.ne.s32.totalorder %s165, %s168
      %p177 = scmp.eq.s32.totalorder %s22, 1
      %p178 = por %p176, %p177
      %p179 = scmp.ne.s32.totalorder %s168, %s169
      %p180 = scmp.eq.s32.totalorder %s22, 0
      %p181 = por %p179, %p180
      %p182 = scmp.ne.s32.totalorder %s168, %s169
      %p183 = scmp.eq.s32.totalorder %s23, 1
      %p184 = por %p182, %p183
      %p186 = scmp.ne.s32.totalorder %s169, %s185
      %p187 = scmp.eq.s32.totalorder %s23, 0
      %p188 = por %p186, %p187
      %s189 = ssub.s32 %s24, %s36
      %p190 = scmp.eq.s32.totalorder %s189, 0
      %s192 = sadd.s32 %s191, 1
      %s193 = scalar_select %p190, %s191, %s192
      %p196 = pneg %p190
      %p197 = scmp.eq.s32.totalorder %s17, 1
      %p198 = por %p196, %p197
      %p199 = scmp.ne.s32.totalorder %s191, %s194
      %p200 = scmp.eq.s32.totalorder %s17, 0
      %p201 = por %p199, %p200
      %p202 = scmp.ne.s32.totalorder %s191, %s194
      %p203 = scmp.eq.s32.totalorder %s22, 1
      %p204 = por %p202, %p203
      %p205 = scmp.ne.s32.totalorder %s194, %s195
      %p206 = scmp.eq.s32.totalorder %s22, 0
      %p207 = por %p205, %p206
      %p208 = scmp.ne.s32.totalorder %s194, %s195
      %p209 = scmp.eq.s32.totalorder %s23, 1
      %p210 = por %p208, %p209
      %p212 = scmp.ne.s32.totalorder %s195, %s211
      %p213 = scmp.eq.s32.totalorder %s23, 0
      %p214 = por %p212, %p213
      %s215 = ssub.s32 %s25, %s32
      %s216 = ssub.s32 %s24, %s36
      %s217 = sor.u32 %s215, %s216
      %p218 = scmp.eq.s32.totalorder %s217, 0
      %s220 = sadd.s32 %s219, 1
      %s221 = scalar_select %p218, %s219, %s220
      %p224 = pneg %p218
      %p225 = scmp.eq.s32.totalorder %s17, 1
      %p226 = por %p224, %p225
      %p227 = scmp.ne.s32.totalorder %s219, %s222
      %p228 = scmp.eq.s32.totalorder %s17, 0
      %p229 = por %p227, %p228
      %p230 = scmp.ne.s32.totalorder %s219, %s222
      %p231 = scmp.eq.s32.totalorder %s22, 1
      %p232 = por %p230, %p231
      %p233 = scmp.ne.s32.totalorder %s222, %s223
      %p234 = scmp.eq.s32.totalorder %s22, 0
      %p235 = por %p233, %p234
      %p236 = scmp.ne.s32.totalorder %s222, %s223
      %p237 = scmp.eq.s32.totalorder %s23, 1
      %p238 = por %p236, %p237
      %p240 = scmp.ne.s32.totalorder %s223, %s239
      %p241 = scmp.eq.s32.totalorder %s23, 0
      %p242 = por %p240, %p241
      %p243 = scmp.le.s32.totalorder 1, %s17
      %p244 = scmp.lt.s32.totalorder %s17, 3
      %p245 = pnand %p243, %p244
      %p246 = pneg %p245
      // Predicated region
      $region9: #{tpu_custom_call.1} parent=5 // pred_check
        _
      $region10: #{tpu_custom_call.1} parent=5 // pred_check_branch
        %248 = sbr.rel (%p245) target = $region12
      $region11: #{tpu_custom_call.1} parent=5 // pred_region
        %s249 = ssub.s32 %s17, 1
        // Predicated region
        $region13: #{tpu_custom_call.1} parent=11 // pred_check
          %p250 = pneg %p50
        $region14: #{tpu_custom_call.1} parent=11 // pred_check_branch
          %252 = sbr.rel (%p250) target = $region16
        $region15: #{tpu_custom_call.1} parent=11 // pred_region
          _
        $region16: #{tpu_custom_call.1} parent=11 // pred_fallthru
          _
        // Predicated region
        $region17: #{tpu_custom_call.1} parent=11 // pred_check
          %p253 = pneg %p71
        $region18: #{tpu_custom_call.1} parent=11 // pred_check_branch
          %255 = sbr.rel (%p253) target = $region20
        $region19: #{tpu_custom_call.1} parent=11 // pred_region
          _
        $region20: #{tpu_custom_call.1} parent=11 // pred_fallthru
          _
        // Predicated region
        $region21: #{tpu_custom_call.1} parent=11 // pred_check
          %p256 = pneg %p92
        $region22: #{tpu_custom_call.1} parent=11 // pred_check_branch
          %258 = sbr.rel (%p256) target = $region24
        $region23: #{tpu_custom_call.1} parent=11 // pred_region
          _
        $region24: #{tpu_custom_call.1} parent=11 // pred_fallthru
          _
        // Predicated region
        $region25: #{tpu_custom_call.1} parent=11 // pred_check
          %p259 = pneg %p113
        $region26: #{tpu_custom_call.1} parent=11 // pred_check_branch
          %261 = sbr.rel (%p259) target = $region28
        $region27: #{tpu_custom_call.1} parent=11 // pred_region
          _
        $region28: #{tpu_custom_call.1} parent=11 // pred_fallthru
          _
        // Predicated region
        $region29: #{tpu_custom_call.1} parent=11 // pred_check
          %p262 = pneg %p134
        $region30: #{tpu_custom_call.1} parent=11 // pred_check_branch
          %264 = sbr.rel (%p262) target = $region32
        $region31: #{tpu_custom_call.1} parent=11 // pred_region
          _
        $region32: #{tpu_custom_call.1} parent=11 // pred_fallthru
          _
        // Predicated region
        $region33: #{tpu_custom_call.1} parent=11 // pred_check
          %p265 = pneg %p155
        $region34: #{tpu_custom_call.1} parent=11 // pred_check_branch
          %267 = sbr.rel (%p265) target = $region36
        $region35: #{tpu_custom_call.1} parent=11 // pred_region
          _
        $region36: #{tpu_custom_call.1} parent=11 // pred_fallthru
          _
        // Predicated region
        $region37: #{tpu_custom_call.1} parent=11 // pred_check
          %p268 = pneg %p181
        $region38: #{tpu_custom_call.1} parent=11 // pred_check_branch
          %270 = sbr.rel (%p268) target = $region40
        $region39: #{tpu_custom_call.1} parent=11 // pred_region
          %s271 = smul.u32 10, %s26
          %p272 = scmp.lt.s32.totalorder %s271, 9
          %s273 = scalar_select %p272, %s271, 9
          %s274 = scalar_lea.vmem %s6, %s273
          %s275 = smul.u32 10, %s26
        $region40: #{tpu_custom_call.1} parent=11 // pred_fallthru
          _
        // Predicated region
        $region41: #{tpu_custom_call.1} parent=11 // pred_check
          %p276 = pneg %p207
        $region42: #{tpu_custom_call.1} parent=11 // pred_check_branch
          %278 = sbr.rel (%p276) target = $region44
        $region43: #{tpu_custom_call.1} parent=11 // pred_region
          %s279 = smul.u32 10, %s26
          %p280 = scmp.lt.s32.totalorder %s279, 9
          %s281 = scalar_select %p280, %s279, 9
          %s282 = smul.addr %s281, 2
          %s283 = smul.addr %s282, 8
          %s284 = scalar_lea.vmem %s7, %s283
          %s285 = smul.u32 10, %s26
        $region44: #{tpu_custom_call.1} parent=11 // pred_fallthru
          _
      $region12: #{tpu_custom_call.1} parent=5 // pred_fallthru
        _
      %p286 = scmp.lt.s32.totalorder %s17, 2
      // Predicated region
      $region45: #{tpu_custom_call.1} parent=5 // pred_check
        %p287 = pneg %p286
      $region46: #{tpu_custom_call.1} parent=5 // pred_check_branch
        %289 = sbr.rel (%p287) target = $region48
      $region47: #{tpu_custom_call.1} parent=5 // pred_region
        _
      $region48: #{tpu_custom_call.1} parent=5 // pred_fallthru
        _
      %p290 = scmp.le.s32.totalorder 1, %s17
      %p291 = scmp.lt.s32.totalorder %s17, 3
      %p292 = pnand %p290, %p291
      %p293 = pneg %p292
      // Predicated region
      $region49: #{tpu_custom_call.1} parent=5 // pred_check
        _
      $region50: #{tpu_custom_call.1} parent=5 // pred_check_branch
        %295 = sbr.rel (%p292) target = $region52
      $region51: #{tpu_custom_call.1} parent=5 // pred_region
        %s296 = ssub.s32 %s17, 1
        %p297 = pneg %p50
        %p298 = pneg %p47
        %p299 = pneg %p71
        %p300 = pneg %p68
        %p301 = pneg %p92
        %p302 = pneg %p89
        %p303 = pneg %p113
        %p304 = pneg %p110
        %p305 = pneg %p134
        %p306 = pneg %p131
        %p307 = pneg %p155
        %p308 = pneg %p152
        %s309 = smul.u32 10, %s26
        %p310 = scmp.lt.s32.totalorder %s309, 9
        %s311 = scalar_select %p310, %s309, 9
        %s312 = scalar_lea.vmem %s6, %s311
        %p313 = pneg %p181
        %p314 = pneg %p178
        %s315 = smul.u32 10, %s26
        %p316 = scmp.lt.s32.totalorder %s315, 9
        %s317 = scalar_select %p316, %s315, 9
        %s318 = smul.addr %s317, 2
        %s319 = smul.addr %s318, 8
        %s320 = scalar_lea.vmem %s7, %s319
        %p321 = pneg %p207
        %p322 = pneg %p204
        %p323 = pneg %p235
        %p324 = pneg %p232
        %s325 = sand.u32 %s222, 1
        %s326 = scalar_lea.sflag [#allocation3], %s325
        %s327 = sand.u32 %s222, 1
        %s328 = smul.addr %s327, 160
        %s329 = scalar_lea.vmem [#allocation2], %s328
        %s330 = smul.u32 10, %s26
        %p331 = scmp.lt.s32.totalorder %s330, 9
        %s332 = scalar_select %p331, %s330, 9
        %s333 = scalar_lea.vmem %s6, %s332
        %s334 = smul.u32 10, %s26
        %s335 = smul.u32 10, %s26
        %p336 = scmp.lt.s32.totalorder %s335, 9
        %s337 = scalar_select %p336, %s335, 9
        %s338 = smul.addr %s337, 2
        %s339 = smul.addr %s338, 8
        %s340 = scalar_lea.vmem %s7, %s339
        %s341 = smul.u32 10, %s26
        %s342 = smul.u32 10, %s26
        %s343 = sshra.s32 %s27, 1
        %s344 = sand.u32 %s27, 1
        %s345 = sshra.s32 %s27, 1
        %s346 = sand.u32 %s27, 1
        %s347 = smul.u32 %s343, 2
        %s348 = smul.u32 %s347, 2
        %s349 = sadd.s32 %s348, %s346
        %s350 = scalar_lea.vmem %s0, %s349
        %v351 = vld [vmem:[%s350] ss:$2 sm:$0x3]
        %v352 = vld [vmem:[%s1] sm:$0xff]
        %v353 = vld [vmem:[%s1 + $0x8] sm:$0xff]
        %v354 = vld [vmem:[%s1 + $0x10] sm:$0xff]
        %v355 = vld [vmem:[%s1 + $0x18] sm:$0xff]
        %v356 = vld [vmem:[%s1 + $0x20] sm:$0xff]
        %v357 = vld [vmem:[%s1 + $0x28] sm:$0xff]
        %v358 = vld [vmem:[%s1 + $0x30] sm:$0xff]
        %v359 = vld [vmem:[%s1 + $0x38] sm:$0xff]
        %v360 = vld [vmem:[%s1 + $0x40] sm:$0xff]
        %v361 = vld [vmem:[%s1 + $0x48] sm:$0xff]
        %v362 = vld [vmem:[%s1 + $0x50] sm:$0xff]
        %v363 = vld [vmem:[%s1 + $0x58] sm:$0xff]
        %v364 = vld [vmem:[%s1 + $0x60] sm:$0xff]
        %v365 = vld [vmem:[%s1 + $0x68] sm:$0xff]
        %v366 = vld [vmem:[%s1 + $0x70] sm:$0xff]
        %v367 = vld [vmem:[%s1 + $0x78] sm:$0xff]
        %v368 = vld [vmem:[%s1 + $0x80] sm:$0xff]
        %v369 = vld [vmem:[%s1 + $0x88] sm:$0xff]
        %v370 = vld [vmem:[%s1 + $0x90] sm:$0xff]
        %v371 = vld [vmem:[%s1 + $0x98] sm:$0xff]
        %v372 = vld [vmem:[%s1 + $0xa0] sm:$0xff]
        %v373 = vld [vmem:[%s1 + $0xa8] sm:$0xff]
        %v374 = vld [vmem:[%s1 + $0xb0] sm:$0xff]
        %v375 = vld [vmem:[%s1 + $0xb8] sm:$0xff]
        %v376 = vld [vmem:[%s1 + $0xc0] sm:$0xff]
        %v377 = vld [vmem:[%s1 + $0xc8] sm:$0xff]
        %v378 = vld [vmem:[%s1 + $0xd0] sm:$0xff]
        %v379 = vld [vmem:[%s1 + $0xd8] sm:$0xff]
        %v380 = vld [vmem:[%s1 + $0xe0] sm:$0xff]
        %v381 = vld [vmem:[%s1 + $0xe8] sm:$0xff]
        %v382 = vld [vmem:[%s1 + $0xf0] sm:$0xff]
        %v383 = vld [vmem:[%s1 + $0xf8] sm:$0xff]
        %v384 = vld [vmem:[%s2] sm:$0x1]
        %v386 = vlaneseq
        %v387 = vshrl.u32 %v386, 7
        %v388 = vsub.s32 0, %v387
        %v389 = vrot.slane %v351, %v388
        %v390 = vlaneseq
        %v391 = vshrl.u32 %v390, 7
        %v392 = vsub.s32 1, %v391
        %v393 = vrot.slane %v351, %v392
        %396 = vmatprep.subr.mxu0 0.0
        %397 = vmatpush1.msra.mxu0 %v367
        %398 = vmatprep.subr.mxu0 0.0
        %399 = vmatpush1.msra.mxu0 %v366
        %400 = vmatprep.subr.mxu0 0.0
        %401 = vmatpush1.msra.mxu0 %v365
        %402 = vmatprep.subr.mxu0 0.0
        %403 = vmatpush1.msra.mxu0 %v364
        %404 = vmatprep.subr.mxu0 0.0
        %405 = vmatpush1.msra.mxu0 %v363
        %406 = vmatprep.subr.mxu0 0.0
        %407 = vmatpush1.msra.mxu0 %v362
        %408 = vmatprep.subr.mxu0 0.0
        %409 = vmatpush1.msra.mxu0 %v361
        %410 = vmatprep.subr.mxu0 0.0
        %411 = vmatpush1.msra.mxu0 %v360
        %412 = vmatprep.subr.mxu0 0.0
        %413 = vmatpush1.msra.mxu0 %v359
        %414 = vmatprep.subr.mxu0 0.0
        %415 = vmatpush1.msra.mxu0 %v358
        %416 = vmatprep.subr.mxu0 0.0
        %417 = vmatpush1.msra.mxu0 %v357
        %418 = vmatprep.subr.mxu0 0.0
        %419 = vmatpush1.msra.mxu0 %v356
        %420 = vmatprep.subr.mxu0 0.0
        %421 = vmatpush1.msra.mxu0 %v355
        %422 = vmatprep.subr.mxu0 0.0
        %423 = vmatpush1.msra.mxu0 %v354
        %424 = vmatprep.subr.mxu0 0.0
        %425 = vmatpush1.msra.mxu0 %v353
        %426 = vmatprep.subr.mxu0 0.0
        %427 = vmatpush1.msra.mxu0 %v352
        %428 = vmatprep.subr.mxu0 0.0
        %429 = vmatpush2.msra.mxu0 %v383
        %430 = vmatprep.subr.mxu0 0.0
        %431 = vmatpush2.msra.mxu0 %v382
        %432 = vmatprep.subr.mxu0 0.0
        %433 = vmatpush2.msra.mxu0 %v381
        %434 = vmatprep.subr.mxu0 0.0
        %435 = vmatpush2.msra.mxu0 %v380
        %436 = vmatprep.subr.mxu0 0.0
        %437 = vmatpush2.msra.mxu0 %v379
        %438 = vmatprep.subr.mxu0 0.0
        %439 = vmatpush2.msra.mxu0 %v378
        %440 = vmatprep.subr.mxu0 0.0
        %441 = vmatpush2.msra.mxu0 %v377
        %442 = vmatprep.subr.mxu0 0.0
        %443 = vmatpush2.msra.mxu0 %v376
        %444 = vmatprep.subr.mxu0 0.0
        %445 = vmatpush2.msra.mxu0 %v375
        %446 = vmatprep.subr.mxu0 0.0
        %447 = vmatpush2.msra.mxu0 %v374
        %448 = vmatprep.subr.mxu0 0.0
        %449 = vmatpush2.msra.mxu0 %v373
        %450 = vmatprep.subr.mxu0 0.0
        %451 = vmatpush2.msra.mxu0 %v372
        %452 = vmatprep.subr.mxu0 0.0
        %453 = vmatpush2.msra.mxu0 %v371
        %454 = vmatprep.subr.mxu0 0.0
        %455 = vmatpush2.msra.mxu0 %v370
        %456 = vmatprep.subr.mxu0 0.0
        %457 = vmatpush2.msra.mxu0 %v369
        %458 = vmatprep.subr.mxu0 0.0
        %459 = vmatpush2.msra.mxu0 %v368
        %460 = vmatprep.mubr.f32.mxu0 %v393
        %461 = vmatmul.mubr.f32.gmra.mxu0 %v389
        %v462 = vpop.f32.mrf.mxu0
        %v463 = vadd.f32 %v384, %v462
        %v464 = vpop.f32.mrf.mxu0
        %465 = vdwg.mxu0
        %v466 = vmax.f32 %v463, 0.0
        %v467 = vld [vmem:[%s3] sm:$0xff]
        %v468 = vld [vmem:[%s3 + $0x8] sm:$0xff]
        %v469 = vld [vmem:[%s4] sm:$0x1]
        %vm470 = vcmask 130048
        %v472 = vsel %vm470, %v466, 0
        %474 = vmatprep.subr.mxu0 0.0
        %475 = vmatpush1.msra.mxu0 0.0
        %476 = vmatprep.subr.mxu0 0.0
        %477 = vmatpush1.msra.mxu0 0.0
        %478 = vmatprep.subr.mxu0 0.0
        %479 = vmatpush1.msra.mxu0 0.0
        %480 = vmatprep.subr.mxu0 0.0
        %481 = vmatpush1.msra.mxu0 0.0
        %482 = vmatprep.subr.mxu0 0.0
        %483 = vmatpush1.msra.mxu0 0.0
        %484 = vmatprep.subr.mxu0 0.0
        %485 = vmatpush1.msra.mxu0 0.0
        %486 = vmatprep.subr.mxu0 0.0
        %487 = vmatpush1.msra.mxu0 0.0
        %488 = vmatprep.subr.mxu0 0.0
        %489 = vmatpush1.msra.mxu0 0.0
        %490 = vmatprep.subr.mxu0 0.0
        %491 = vmatpush1.msra.mxu0 0.0
        %492 = vmatprep.subr.mxu0 0.0
        %493 = vmatpush1.msra.mxu0 0.0
        %494 = vmatprep.subr.mxu0 0.0
        %495 = vmatpush1.msra.mxu0 0.0
        %496 = vmatprep.subr.mxu0 0.0
        %497 = vmatpush1.msra.mxu0 0.0
        %498 = vmatprep.subr.mxu0 0.0
        %499 = vmatpush1.msra.mxu0 0.0
        %500 = vmatprep.subr.mxu0 0.0
        %501 = vmatpush1.msra.mxu0 0.0
        %502 = vmatprep.subr.mxu0 0.0
        %503 = vmatpush1.msra.mxu0 %v468
        %504 = vmatprep.subr.mxu0 0.0
        %505 = vmatpush1.msra.mxu0 %v467
        %506 = vmatprep.subr.mxu0 0.0
        %507 = vmatpush2.msra.mxu0 0.0
        %508 = vmatprep.subr.mxu0 0.0
        %509 = vmatpush2.msra.mxu0 0.0
        %510 = vmatprep.subr.mxu0 0.0
        %511 = vmatpush2.msra.mxu0 0.0
        %512 = vmatprep.subr.mxu0 0.0
        %513 = vmatpush2.msra.mxu0 0.0
        %514 = vmatprep.subr.mxu0 0.0
        %515 = vmatpush2.msra.mxu0 0.0
        %516 = vmatprep.subr.mxu0 0.0
        %517 = vmatpush2.msra.mxu0 0.0
        %518 = vmatprep.subr.mxu0 0.0
        %519 = vmatpush2.msra.mxu0 0.0
        %520 = vmatprep.subr.mxu0 0.0
        %521 = vmatpush2.msra.mxu0 0.0
        %522 = vmatprep.subr.mxu0 0.0
        %523 = vmatpush2.msra.mxu0 0.0
        %524 = vmatprep.subr.mxu0 0.0
        %525 = vmatpush2.msra.mxu0 0.0
        %526 = vmatprep.subr.mxu0 0.0
        %527 = vmatpush2.msra.mxu0 0.0
        %528 = vmatprep.subr.mxu0 0.0
        %529 = vmatpush2.msra.mxu0 0.0
        %530 = vmatprep.subr.mxu0 0.0
        %531 = vmatpush2.msra.mxu0 0.0
        %532 = vmatprep.subr.mxu0 0.0
        %533 = vmatpush2.msra.mxu0 0.0
        %534 = vmatprep.subr.mxu0 0.0
        %535 = vmatpush2.msra.mxu0 0.0
        %536 = vmatprep.subr.mxu0 0.0
        %537 = vmatpush2.msra.mxu0 0.0
        %538 = vmatprep.mubr.f32.mxu0 0.0
        %539 = vmatmul.mubr.f32.gmra.mxu0 %v472
        %v540 = vpop.f32.mrf.mxu0
        %v541 = vadd.f32 %v469, %v540
        %v542 = vpop.f32.mrf.mxu0
        %543 = vdwg.mxu0
        %v544 = vld [vmem:[%s5] sm:$0xf]
        %v545 = vlaneseq
        %v546 = vshrl.u32 %v545, 7
        %v547 = vsub.s32 0, %v546
        %v548 = vrot.slane %v541, %v547
        %v549 = vadd.f32 %v544, %v548
        %v550 = vld [vmem:[%s333] sm:$0x1]
        %v551 = vld [vmem:[%s333 + $0x1] sm:$0x1]
        %v552 = vld [vmem:[%s333 + $0x2] sm:$0x1]
        %v553 = vld [vmem:[%s333 + $0x3] sm:$0x1]
        %v554 = vld [vmem:[%s333 + $0x4] sm:$0x1]
        %v555 = vld [vmem:[%s333 + $0x5] sm:$0x1]
        %v556 = vld [vmem:[%s333 + $0x6] sm:$0x1]
        %v557 = vld [vmem:[%s333 + $0x7] sm:$0x1]
        %v558 = vld [vmem:[%s333 + $0x8] sm:$0x1]
        %v559 = vld [vmem:[%s333 + $0x9] sm:$0x1]
        %560 = vst [vmem:[%s329] sm:$0x1] %v550
        %561 = vst [vmem:[%s329 + $0x10] sm:$0x1] %v551
        %562 = vst [vmem:[%s329 + $0x20] sm:$0x1] %v552
        %563 = vst [vmem:[%s329 + $0x30] sm:$0x1] %v553
        %564 = vst [vmem:[%s329 + $0x40] sm:$0x1] %v554
        %565 = vst [vmem:[%s329 + $0x50] sm:$0x1] %v555
        %566 = vst [vmem:[%s329 + $0x60] sm:$0x1] %v556
        %567 = vst [vmem:[%s329 + $0x70] sm:$0x1] %v557
        %568 = vst [vmem:[%s329 + $0x80] sm:$0x1] %v558
        %569 = vst [vmem:[%s329 + $0x90] sm:$0x1] %v559
        %570 = vst [vmem:[%s329 + $0x1] sm:$0xf] %v549
        %571 = vst [vmem:[%s329 + $0x11] sm:$0xf] %v549
        %572 = vst [vmem:[%s329 + $0x21] sm:$0xf] %v549
        %573 = vst [vmem:[%s329 + $0x31] sm:$0xf] %v549
        %574 = vst [vmem:[%s329 + $0x41] sm:$0xf] %v549
        %575 = vst [vmem:[%s329 + $0x51] sm:$0xf] %v549
        %576 = vst [vmem:[%s329 + $0x61] sm:$0xf] %v549
        %577 = vst [vmem:[%s329 + $0x71] sm:$0xf] %v549
        %578 = vst [vmem:[%s329 + $0x81] sm:$0xf] %v549
        %579 = vst [vmem:[%s329 + $0x91] sm:$0xf] %v549
        %v580 = vld [vmem:[%s340] sm:$0xff]
        %v581 = vld [vmem:[%s340 + $0x8] sm:$0x7]
        %v582 = vld [vmem:[%s340 + $0x10] sm:$0xff]
        %v583 = vld [vmem:[%s340 + $0x18] sm:$0x7]
        %v584 = vld [vmem:[%s340 + $0x20] sm:$0xff]
        %v585 = vld [vmem:[%s340 + $0x28] sm:$0x7]
        %v586 = vld [vmem:[%s340 + $0x30] sm:$0xff]
        %v587 = vld [vmem:[%s340 + $0x38] sm:$0x7]
        %v588 = vld [vmem:[%s340 + $0x40] sm:$0xff]
        %v589 = vld [vmem:[%s340 + $0x48] sm:$0x7]
        %v590 = vld [vmem:[%s340 + $0x50] sm:$0xff]
        %v591 = vld [vmem:[%s340 + $0x58] sm:$0x7]
        %v592 = vld [vmem:[%s340 + $0x60] sm:$0xff]
        %v593 = vld [vmem:[%s340 + $0x68] sm:$0x7]
        %v594 = vld [vmem:[%s340 + $0x70] sm:$0xff]
        %v595 = vld [vmem:[%s340 + $0x78] sm:$0x7]
        %v596 = vld [vmem:[%s340 + $0x80] sm:$0xff]
        %v597 = vld [vmem:[%s340 + $0x88] sm:$0x7]
        %v598 = vld [vmem:[%s340 + $0x90] sm:$0xff]
        %v599 = vld [vmem:[%s340 + $0x98] sm:$0x7]
        %600 = vst [vmem:[%s329 + $0x5] sm:$0xff] %v580
        %601 = vst [vmem:[%s329 + $0xd] sm:$0x7] %v581
        %602 = vst [vmem:[%s329 + $0x15] sm:$0xff] %v582
        %603 = vst [vmem:[%s329 + $0x1d] sm:$0x7] %v583
        %604 = vst [vmem:[%s329 + $0x25] sm:$0xff] %v584
        %605 = vst [vmem:[%s329 + $0x2d] sm:$0x7] %v585
        %606 = vst [vmem:[%s329 + $0x35] sm:$0xff] %v586
        %607 = vst [vmem:[%s329 + $0x3d] sm:$0x7] %v587
        %608 = vst [vmem:[%s329 + $0x45] sm:$0xff] %v588
        %609 = vst [vmem:[%s329 + $0x4d] sm:$0x7] %v589
        %610 = vst [vmem:[%s329 + $0x55] sm:$0xff] %v590
        %611 = vst [vmem:[%s329 + $0x5d] sm:$0x7] %v591
        %612 = vst [vmem:[%s329 + $0x65] sm:$0xff] %v592
        %613 = vst [vmem:[%s329 + $0x6d] sm:$0x7] %v593
        %614 = vst [vmem:[%s329 + $0x75] sm:$0xff] %v594
        %615 = vst [vmem:[%s329 + $0x7d] sm:$0x7] %v595
        %616 = vst [vmem:[%s329 + $0x85] sm:$0xff] %v596
        %617 = vst [vmem:[%s329 + $0x8d] sm:$0x7] %v597
        %618 = vst [vmem:[%s329 + $0x95] sm:$0xff] %v598
        %619 = vst [vmem:[%s329 + $0x9d] sm:$0x7] %v599
        %s620 = sand.u32 %s222, 1
        %s621 = scalar_lea.sflag [#allocation3], %s620
        %s622 = sand.u32 %s222, 1
        %s623 = smul.addr %s622, 160
        %s624 = scalar_lea.vmem [#allocation2], %s623
        // Predicated region
        $region53: #{tpu_custom_call.1} parent=51 // pred_check
          %p625 = pneg %p232
        $region54: #{tpu_custom_call.1} parent=51 // pred_check_branch
          %627 = sbr.rel (%p625) target = $region56
        $region55: #{tpu_custom_call.1} parent=51 // pred_region
          %s628 = smul.u32 10, %s26
          %s630 = ssub.s32 2560, 2560
          %631 = vsyncadd %s621, %s630
          %s632 = smul.addr %s628, 2
          %s633 = smul.addr %s27, 20
          %s634 = sadd.s32 %s632, %s633
          %s635 = smul.addr %s634, 128
          %s636 = scalar_lea.hbm %s8, %s635
          %s637 = sshll.u32 %s624, 4
          %s638 = int_to_ptr.vmem [resolvable:$true] %s637
          %643 = dma.vmem_to_hbm [thread:$0]  %s638, 2560, %s636, %s621, 128, 128, 8
        $region56: #{tpu_custom_call.1} parent=51 // pred_fallthru
          _
      $region52: #{tpu_custom_call.1} parent=5 // pred_fallthru
        _
      %p644 = scmp.le.s32.totalorder 2, %s17
      // Predicated region
      $region57: #{tpu_custom_call.1} parent=5 // pred_check
        %p645 = pneg %p644
      $region58: #{tpu_custom_call.1} parent=5 // pred_check_branch
        %647 = sbr.rel (%p645) target = $region60
      $region59: #{tpu_custom_call.1} parent=5 // pred_region
        %s648 = ssub.s32 %s17, 2
        // Predicated region
        $region61: #{tpu_custom_call.1} parent=59 // pred_check
          %p649 = pneg %p238
        $region62: #{tpu_custom_call.1} parent=59 // pred_check_branch
          %651 = sbr.rel (%p649) target = $region64
        $region63: #{tpu_custom_call.1} parent=59 // pred_region
          %s652 = sand.u32 %s223, 1
          %s653 = scalar_lea.sflag [#allocation3], %s652
          %s654 = sand.u32 %s223, 1
          %s655 = smul.addr %s654, 160
          %s656 = scalar_lea.vmem [#allocation2], %s655
          %657 = dma.done %s653, 2560
        $region64: #{tpu_custom_call.1} parent=59 // pred_fallthru
          _
      $region60: #{tpu_custom_call.1} parent=5 // pred_fallthru
        _
    $region6: #{tpu_custom_call.1} parent=1 // loop_footer
      %s21 = sadd.s32 1, %s17
    $region7: #{tpu_custom_call.1} parent=1 // loop_footer_branch
      %16 = sbr.rel target = $region3
    $region8: #{tpu_custom_call.1} parent=1 // loop_exit
      _
    %658 = vsyncpa [#allocation3], 1
    %s659 = scalar_lea.sflag [#allocation3], 1
    %660 = vsyncpa %s659, 1

</llo_original>
